<compile_context>
chip_gen: v6e
topology: v6e:2x2x1
jax: 0.10.0
libtpu: 0.0.40
codegen_flags: <defaults>
</compile_context>

<pallas_src>
import functools

import numpy as np
import jax
import jax.numpy as jnp
from jax.experimental import pallas as pl
from jax.experimental.pallas import tpu as pltpu

LANE = 128


def _rup(x, m):
    return ((x + m - 1) // m) * m


def _device_kind():
    try:
        return jax.devices()[0].device_kind.lower()
    except Exception:
        return ""


def _vmem_limit_bytes():
    kind = _device_kind()
    if "v7" in kind:
        return 48 * 1024 * 1024          # 64 MiB physical on v7x -> leave headroom
    if "v5" in kind or "v6" in kind:
        return 100 * 1024 * 1024         # 128 MiB physical on v5e / v6e
    return 64 * 1024 * 1024


_VMEM_LIMIT = _vmem_limit_bytes()
_IS_V5 = "v5" in _device_kind()


def _cparams(*sems):
    return pltpu.CompilerParams(dimension_semantics=tuple(sems),
                                vmem_limit_bytes=_VMEM_LIMIT)


def _choose_row_tile(H, Wp, target_rows=512, max_rows=2048):
    """Rows-of-the-image tile TH: divides H, lane/sublane friendly, ~512 flat rows."""
    cands = [th for th in range(1, H)
             if H % th == 0 and (th * Wp) % 8 == 0 and th * Wp <= max_rows]
    if not cands:
        return H
    return min(cands, key=lambda th: abs(th * Wp - target_rows))


def _choose_group_block(Cmid, Cmid_p, G):
    """MXU-native diagonal block width for the grouped conv weights."""
    s = max(1, Cmid // G)
    prefs = (128, 256) if _IS_V5 else (256, 128)
    for blk in prefs:
        if blk <= Cmid_p and Cmid_p % blk == 0 and blk % s == 0:
            return blk
    return Cmid_p   # dense fallback (groups straddle the block boundary)


# ---------------------------------------------------------------------------
# Kernel 1: 1x1 conv (matmul, BN scale pre-folded into bf16 weights) + bias (+ReLU)
# ---------------------------------------------------------------------------
def _mm_bias_act_kernel(x_ref, w_ref, b_ref, o_ref, *, relu):
    y = jnp.dot(x_ref[...], w_ref[...], preferred_element_type=jnp.float32) + b_ref[...]
    if relu:
        y = jnp.maximum(y, 0.0)
    o_ref[...] = y.astype(o_ref.dtype)


def conv1x1_bias_act(x2d, w, b, relu, out_dtype=jnp.bfloat16, tile=256):
    N, Cin = x2d.shape
    Cout = w.shape[1]
    Np = _rup(N, tile)
    if Np != N:
        x2d = jnp.pad(x2d, ((0, Np - N), (0, 0)))
    out = pl.pallas_call(
        functools.partial(_mm_bias_act_kernel, relu=relu),
        out_shape=jax.ShapeDtypeStruct((Np, Cout), out_dtype),
        grid=(Np // tile,),
        in_specs=[pl.BlockSpec((tile, Cin), lambda i: (i, 0)),
                  pl.BlockSpec((Cin, Cout), lambda i: (0, 0)),
                  pl.BlockSpec((1, Cout), lambda i: (0, 0))],
        out_specs=pl.BlockSpec((tile, Cout), lambda i: (i, 0)),
        compiler_params=_cparams("parallel"),
    )(x2d, w, b)
    return out[:N] if Np != N else out


# ---------------------------------------------------------------------------
# Kernel 2: fused, row-tiled grouped dilated 3x3 convs for ALL branches + GAP.
#   grid = (B, row_tiles).  Each step assembles one contiguous (rows + halo) bf16
#   slab; each of the 9 taps of each branch is a constant-row-offset matmul on a
#   diagonal 128/256-wide weight block (flat-shift im2col).  GAP is accumulated
#   across row tiles in the resident gap output block.
# ---------------------------------------------------------------------------
def _branch_kernel(xmain_ref, xhalo_ref, mask_ref, w_ref, b_ref,
                   feat_ref, gap_ref, slab_ref, *,
                   M, TH, Wp, W, HALO, maxd, n_blk, BLK, inv_hw, slab_rows):
    t = pl.program_id(1)
    rows = TH * Wp
    halo_rows = HALO * Wp

    # Assemble contiguous slab = [main rows | halo rows | zero tail].
    slab_ref[pl.ds(0, rows), :] = xmain_ref[0]
    slab_ref[pl.ds(rows, halo_rows), :] = xhalo_ref[0, 0]
    tail = slab_rows - (rows + halo_rows)
    if tail > 0:
        slab_ref[pl.ds(rows + halo_rows, tail), :] = jnp.zeros(
            (tail, slab_ref.shape[1]), slab_ref.dtype)

    mask = mask_ref[...]                       # (rows, 1): 1.0 for valid width columns

    @pl.when(t == 0)
    def _():
        gap_ref[...] = jnp.zeros_like(gap_ref)

    for m in range(M):
        dil = m + 1
        off = maxd - dil
        for blk in range(n_blk):
            c0 = blk * BLK
            acc = jnp.zeros((rows, BLK), jnp.float32)
            for kh in range(3):
                for kw in range(3):
                    shift = (off + kh * dil) * Wp + (off + kw * dil)
                    xs = slab_ref[pl.ds(shift, rows), pl.ds(c0, BLK)]
                    acc = acc + jnp.dot(xs, w_ref[m, kh * 3 + kw, blk],
                                        preferred_element_type=jnp.float32)
            y = jnp.maximum(acc + b_ref[m, :, pl.ds(c0, BLK)], 0.0) * mask
            feat_ref[0, m, :, pl.ds(c0, BLK)] = y.astype(feat_ref.dtype)
            g = jnp.sum(y, axis=0, keepdims=True)                      # (1, BLK)
            gap_ref[0, pl.ds(m, 1), pl.ds(c0, BLK)] += g

    @pl.when(t == pl.num_programs(1) - 1)
    def _():
        gap_ref[...] = gap_ref[...] * inv_hw


def fused_branch_conv_gap(xmain, xhalo, mask, w_blocks, bias, *,
                          M, H, W, Wp, TH, maxd, BLK):
    B, R, C = xmain.shape                      # R = H * Wp
    T = H // TH
    HALO = 2 * maxd
    n_blk = C // BLK
    rows = TH * Wp
    slab_rows = _rup(rows + HALO * Wp + 2 * maxd, 8)
    kernel = functools.partial(
        _branch_kernel, M=M, TH=TH, Wp=Wp, W=W, HALO=HALO, maxd=maxd,
        n_blk=n_blk, BLK=BLK, inv_hw=1.0 / float(H * W), slab_rows=slab_rows)
    return pl.pallas_call(
        kernel,
        out_shape=(jax.ShapeDtypeStruct((B, M, R, C), jnp.bfloat16),
                   jax.ShapeDtypeStruct((B, M, C), jnp.float32)),
        grid=(B, T),
        in_specs=[pl.BlockSpec((1, rows, C), lambda b, t: (b, t, 0)),
                  pl.BlockSpec((1, 1, HALO * Wp, C), lambda b, t: (b, t, 0, 0)),
                  pl.BlockSpec((rows, 1), lambda b, t: (t, 0)),
                  pl.BlockSpec((M, 9, n_blk, BLK, BLK), lambda b, t: (0, 0, 0, 0, 0)),
                  pl.BlockSpec((M, 1, C), lambda b, t: (0, 0, 0))],
        out_specs=(pl.BlockSpec((1, M, rows, C), lambda b, t: (b, 0, t, 0)),
                   pl.BlockSpec((1, M, C), lambda b, t: (b, 0, 0))),
        scratch_shapes=[pltpu.VMEM((slab_rows, C), jnp.bfloat16)],
        compiler_params=_cparams("parallel", "arbitrary"),
    )(xmain, xhalo, mask, w_blocks, bias)


# ---------------------------------------------------------------------------
# Kernel 3: SK attention weights for the whole batch in one tiny call.
#   S = sum_m GAP_m ; Z = relu(S@wfc + bfc) ; logits_m = Z@watt_m + batt_m ;
#   softmax over M.  Output layout: (B, M, C).
# ---------------------------------------------------------------------------
def _attn_kernel(gap_ref, wfc_ref, bfc_ref, watt_ref, batt_ref, att_ref, *, M):
    S = gap_ref[:, 0, :]
    for m in range(1, M):
        S = S + gap_ref[:, m, :]                                       # (B, C)
    Z = jnp.dot(S.astype(jnp.bfloat16), wfc_ref[...],
                preferred_element_type=jnp.float32) + bfc_ref[...]
    Z = jnp.maximum(Z, 0.0).astype(jnp.bfloat16)                       # (B, d)
    logits = [jnp.dot(Z, watt_ref[m], preferred_element_type=jnp.float32) + batt_ref[m]
              for m in range(M)]
    mx = logits[0]
    for m in range(1, M):
        mx = jnp.maximum(mx, logits[m])
    exps = [jnp.exp(l - mx) for l in logits]
    den = exps[0]
    for m in range(1, M):
        den = den + exps[m]
    inv = pl.reciprocal(den, approx=True)
    for m in range(M):
        att_ref[:, pl.ds(m, 1), :] = (exps[m] * inv)[:, None, :].astype(att_ref.dtype)


def sk_attention(gap, wfc, bfc, watt, batt):
    B, M, C = gap.shape
    d = wfc.shape[1]
    return pl.pallas_call(
        functools.partial(_attn_kernel, M=M),
        out_shape=jax.ShapeDtypeStruct((B, M, C), jnp.float32),
        grid=(1,),
        in_specs=[pl.BlockSpec((B, M, C), lambda i: (0, 0, 0)),
                  pl.BlockSpec((C, d), lambda i: (0, 0)),
                  pl.BlockSpec((1, d), lambda i: (0, 0)),
                  pl.BlockSpec((M, d, C), lambda i: (0, 0, 0)),
                  pl.BlockSpec((M, 1, C), lambda i: (0, 0, 0))],
        out_specs=pl.BlockSpec((B, M, C), lambda i: (0, 0, 0)),
        compiler_params=_cparams("arbitrary"),
    )(gap, wfc, bfc, watt, batt)


# ---------------------------------------------------------------------------
# Kernel 4 (fused): V = sum_m a_m * feat_m ; conv3 (1x1 + folded BN) ; shortcut
#   (1x1 projection or identity) ; residual add ; ReLU.  Single flattened
#   parallel grid axis over (batch * row_tiles).
# ---------------------------------------------------------------------------
def _vsum_conv3_kernel(*refs, M, has_proj):
    if has_proj:
        feat_ref, att_ref, x_ref, w3_ref, b3_ref, wsc_ref, bsc_ref, out_ref = refs
    else:
        feat_ref, att_ref, x_ref, w3_ref, b3_ref, out_ref = refs
    V = feat_ref[0, 0].astype(jnp.float32) * att_ref[0, pl.ds(0, 1), :]
    for m in range(1, M):
        V = V + feat_ref[0, m].astype(jnp.float32) * att_ref[0, pl.ds(m, 1), :]
    y = jnp.dot(V.astype(jnp.bfloat16), w3_ref[...],
                preferred_element_type=jnp.float32) + b3_ref[...]
    if has_proj:
        y = y + jnp.dot(x_ref[0], wsc_ref[...],
                        preferred_element_type=jnp.float32) + bsc_ref[...]
    else:
        y = y + x_ref[0].astype(jnp.float32)
    out_ref[0] = jnp.maximum(y, 0.0).astype(out_ref.dtype)


def fused_vsum_conv3(feats, att, x_res, w3, b3, wsc, bsc, *, TH, Wp):
    B, M, R, Cmid = feats.shape
    Cin = x_res.shape[-1]
    Cout = w3.shape[1]
    rows = TH * Wp
    T = R // rows
    has_proj = wsc is not None
    in_specs = [pl.BlockSpec((1, M, rows, Cmid), lambda i: (i // T, 0, i % T, 0)),
                pl.BlockSpec((1, M, Cmid), lambda i: (i // T, 0, 0)),
                pl.BlockSpec((1, rows, Cin), lambda i: (i // T, i % T, 0)),
                pl.BlockSpec((Cmid, Cout), lambda i: (0, 0)),
                pl.BlockSpec((1, Cout), lambda i: (0, 0))]
    args = [feats, att, x_res, w3, b3]
    if has_proj:
        in_specs += [pl.BlockSpec((Cin, Cout), lambda i: (0, 0)),
                     pl.BlockSpec((1, Cout), lambda i: (0, 0))]
        args += [wsc, bsc]
    # TODO(synk): split Cout across a grid axis when Cout_p >= 512 to bound per-step VMEM.
    return pl.pallas_call(
        functools.partial(_vsum_conv3_kernel, M=M, has_proj=has_proj),
        out_shape=jax.ShapeDtypeStruct((B, R, Cout), jnp.float32),
        grid=(B * T,),
        in_specs=in_specs,
        out_specs=pl.BlockSpec((1, rows, Cout), lambda i: (i // T, i % T, 0)),
        compiler_params=_cparams("parallel"),
    )(*args)


# ---------------------------------------------------------------------------
# Parameter setup (glue: BN folding, grouped -> diagonal blocks, lane padding, bf16)
# ---------------------------------------------------------------------------
def fold_bn(bn, eps=1e-5):
    scale = bn['gamma'] * jax.lax.rsqrt(bn['var'] + eps)
    bias = bn['beta'] - bn['mean'] * scale
    return scale, bias


def grouped_to_dense(w, G):
    # (Cout, Cin/G, 3, 3) torch layout -> dense block-diagonal (3, 3, Cin, Cout)
    w = np.asarray(w)
    Cout, cin_pg = w.shape[0], w.shape[1]
    cout_pg = Cout // G
    Cin = cin_pg * G
    dense = np.zeros((3, 3, Cin, Cout), np.float32)
    for g in range(G):
        blk = w[g * cout_pg:(g + 1) * cout_pg]           # (cout_pg, cin_pg, 3, 3)
        dense[:, :, g * cin_pg:(g + 1) * cin_pg,
              g * cout_pg:(g + 1) * cout_pg] = np.transpose(blk, (2, 3, 1, 0))
    return dense


def _pad2(a, r, c):
    return jnp.pad(a, ((0, r - a.shape[0]), (0, c - a.shape[1])))


def init_raw_params(key, Cin, Cmid, Cout, M, G, d):
    ks = iter(jax.random.split(key, 64))

    def nrm(shape, s=0.1):
        return s * jax.random.normal(next(ks), shape, jnp.float32)

    def bn(c):
        return dict(gamma=1.0 + 0.1 * jax.random.normal(next(ks), (c,), jnp.float32),
                    beta=0.1 * jax.random.normal(next(ks), (c,), jnp.float32),
                    mean=0.1 * jax.random.normal(next(ks), (c,), jnp.float32),
                    var=jnp.abs(1.0 + 0.1 * jax.random.normal(next(ks), (c,), jnp.float32)))

    p = {'w1': nrm((Cin, Cmid)), 'bn1': bn(Cmid)}
    p['w_br'] = [nrm((Cmid, Cmid // G, 3, 3)) for _ in range(M)]
    p['bn_br'] = [bn(Cmid) for _ in range(M)]
    p['wfc'] = nrm((Cmid, d)); p['bnfc'] = bn(d)
    p['watt'] = nrm((M, d, Cmid)); p['batt'] = nrm((M, Cmid))
    p['w3'] = nrm((Cmid, Cout)); p['bn3'] = bn(Cout)
    if Cin != Cout:
        p['wsc'] = nrm((Cin, Cout)); p['bnsc'] = bn(Cout)
    return p


def prepare_params(raw, Cin, Cmid, Cout, M, G, d):
    Cin_p, Cmid_p, Cout_p, d_p = (_rup(c, LANE) for c in (Cin, Cmid, Cout, d))
    pp = {'Cin_p': Cin_p, 'Cmid_p': Cmid_p, 'Cout_p': Cout_p, 'd_p': d_p, 'M': M}

    s1, b1 = fold_bn(raw['bn1'])
    pp['w1'] = _pad2(raw['w1'] * s1[None, :], Cin_p, Cmid_p).astype(jnp.bfloat16)
    pp['b1'] = jnp.pad(b1, (0, Cmid_p - Cmid)).reshape(1, Cmid_p)

    BLK = _choose_group_block(Cmid, Cmid_p, G)
    n_blk = Cmid_p // BLK
    pp['BLK'] = BLK
    blk_all, dense_all, b_all = [], [], []
    for m in range(M):
        dense = grouped_to_dense(raw['w_br'][m], G)                  # (3,3,Cmid,Cmid)
        s, b = fold_bn(raw['bn_br'][m])
        dense = dense * np.asarray(s)[None, None, None, :]
        dense = np.pad(dense, ((0, 0), (0, 0),
                               (0, Cmid_p - Cmid), (0, Cmid_p - Cmid)))
        dense = dense.reshape(9, Cmid_p, Cmid_p)
        dense_all.append(dense)
        blocks = np.stack([dense[:, i * BLK:(i + 1) * BLK, i * BLK:(i + 1) * BLK]
                           for i in range(n_blk)], axis=1)           # (9, n_blk, BLK, BLK)
        blk_all.append(blocks)
        b_all.append(np.pad(np.asarray(b), (0, Cmid_p - Cmid)))
    pp['w_br_blk'] = jnp.asarray(np.stack(blk_all)).astype(jnp.bfloat16)
    pp['w_br_dense'] = jnp.asarray(np.stack(dense_all)).astype(jnp.bfloat16)  # ref only
    pp['b_br'] = jnp.asarray(np.stack(b_all)).reshape(M, 1, Cmid_p)

    sfc, bfc = fold_bn(raw['bnfc'])
    pp['wfc'] = _pad2(raw['wfc'] * sfc[None, :], Cmid_p, d_p).astype(jnp.bfloat16)
    pp['bfc'] = jnp.pad(bfc, (0, d_p - d)).reshape(1, d_p)
    pp['watt'] = jnp.pad(raw['watt'], ((0, 0), (0, d_p - d),
                                       (0, Cmid_p - Cmid))).astype(jnp.bfloat16)
    pp['batt'] = jnp.pad(raw['batt'], ((0, 0), (0, Cmid_p - Cmid))).reshape(M, 1, Cmid_p)

    s3, b3 = fold_bn(raw['bn3'])
    pp['w3'] = _pad2(raw['w3'] * s3[None, :], Cmid_p, Cout_p).astype(jnp.bfloat16)
    pp['b3'] = jnp.pad(b3, (0, Cout_p - Cout)).reshape(1, Cout_p)

    if 'wsc' in raw:
        ssc, bsc = fold_bn(raw['bnsc'])
        pp['wsc'] = _pad2(raw['wsc'] * ssc[None, :], Cin_p, Cout_p).astype(jnp.bfloat16)
        pp['bsc'] = jnp.pad(bsc, (0, Cout_p - Cout)).reshape(1, Cout_p)
    else:
        assert Cin == Cout, "identity shortcut requires in_features == out_features"
        pp['wsc'] = None
        pp['bsc'] = None
    return pp


# ---------------------------------------------------------------------------
# Full SKUnit forward (Pallas kernels on the hot path; pads/reshapes are glue)
# ---------------------------------------------------------------------------
def sk_unit_forward(x_nchw, pp, M, Cout):
    B, Cin0, H, W = x_nchw.shape
    Cin_p, Cmid_p, Cout_p = pp['Cin_p'], pp['Cmid_p'], pp['Cout_p']
    maxd = M
    Wp = W + 2 * maxd
    TH = _choose_row_tile(H, Wp)
    T = H // TH

    # NHWC, channel pad to lane multiple; big intermediates in bf16.
    x = jnp.transpose(x_nchw, (0, 2, 3, 1)).astype(jnp.float32)
    x = jnp.pad(x, ((0, 0), (0, 0), (0, 0), (0, Cin_p - Cin0))).astype(jnp.bfloat16)

    # conv1: 1x1 + folded BN + ReLU
    h1 = conv1x1_bias_act(x.reshape(B * H * W, Cin_p), pp['w1'], pp['b1'], relu=True)
    h1 = h1.reshape(B, H, W, Cmid_p)

    # Shared halo pad (bf16) + non-overlapping main tiles + duplicated halo strips so
    # the branch kernel can be row-tiled with plain auto-pipelined BlockSpecs.
    xp = jnp.pad(h1, ((0, 0), (maxd, maxd), (maxd, maxd), (0, 0)))
    xmain = xp[:, :H].reshape(B, H * Wp, Cmid_p)
    xhalo = jnp.stack([xp[:, (t + 1) * TH:(t + 1) * TH + 2 * maxd] for t in range(T)],
                      axis=1).reshape(B, T, 2 * maxd * Wp, Cmid_p)

    # Column-validity mask (1.0 for the first W columns of every Wp-wide row).
    mask = jnp.asarray(np.tile((np.arange(Wp) < W).astype(np.float32), H).reshape(-1, 1))

    feats, gap = fused_branch_conv_gap(xmain, xhalo, mask, pp['w_br_blk'], pp['b_br'],
                                       M=M, H=H, W=W, Wp=Wp, TH=TH, maxd=maxd,
                                       BLK=pp['BLK'])

    att = sk_attention(gap, pp['wfc'], pp['bfc'], pp['watt'], pp['batt'])

    # Residual input in the same (B, H*Wp, C) lane-dense layout (zero width pad).
    x_res = jnp.pad(x, ((0, 0), (0, 0), (0, 2 * maxd), (0, 0))).reshape(B, H * Wp, Cin_p)

    out = fused_vsum_conv3(feats, att, x_res, pp['w3'], pp['b3'],
                           pp['wsc'], pp['bsc'], TH=TH, Wp=Wp)
    out = out.reshape(B, H, Wp, Cout_p)[:, :, :W, :Cout]
    return jnp.transpose(out, (0, 3, 1, 2))                           # back to NCHW


# ---------------------------------------------------------------------------
# Pure-JAX reference (same folded/padded/bf16 params) for a sanity check
# ---------------------------------------------------------------------------
def sk_unit_reference(x_nchw, pp, M, Cout):
    B, Cin0, H, W = x_nchw.shape
    Cin_p, Cmid_p, Cout_p = pp['Cin_p'], pp['Cmid_p'], pp['Cout_p']
    maxd = M

    def bdot(a, w):
        return jnp.dot(a.astype(jnp.bfloat16), w, preferred_element_type=jnp.float32)

    x = jnp.transpose(x_nchw, (0, 2, 3, 1)).astype(jnp.float32)
    x = jnp.pad(x, ((0, 0), (0, 0), (0, 0), (0, Cin_p - Cin0))).astype(jnp.bfloat16)
    x2 = x.reshape(-1, Cin_p)

    h1 = jnp.maximum(bdot(x2, pp['w1']) + pp['b1'], 0.0).astype(jnp.bfloat16)
    h1 = h1.reshape(B, H, W, Cmid_p)
    xp = jnp.pad(h1, ((0, 0), (maxd, maxd), (maxd, maxd), (0, 0)))
    feats, gaps = [], []
    for m in range(M):
        dil = m + 1
        off = maxd - dil
        acc = jnp.zeros((B, H, W, Cmid_p), jnp.float32)
        for kh in range(3):
            for kw in range(3):
                win = xp[:, off + kh * dil:off + kh * dil + H,
                         off + kw * dil:off + kw * dil + W, :]
                acc = acc + jnp.einsum('bhwc,cd->bhwd', win,
                                       pp['w_br_dense'][m][kh * 3 + kw],
                                       preferred_element_type=jnp.float32)
        f = jnp.maximum(acc + pp['b_br'][m].reshape(1, 1, 1, -1), 0.0)
        gaps.append(jnp.mean(f, axis=(1, 2)))
        feats.append(f.astype(jnp.bfloat16))
    S = sum(gaps)                                                      # (B, Cmid_p)
    Z = jnp.maximum(bdot(S, pp['wfc']) + pp['bfc'], 0.0)
    logits = jnp.stack([bdot(Z, pp['watt'][m]) + pp['batt'][m] for m in range(M)], axis=1)
    a = jax.nn.softmax(logits, axis=1)                                 # (B, M, Cmid_p)
    V = sum(feats[m].astype(jnp.float32) * a[:, m][:, None, None, :] for m in range(M))
    y = bdot(V.reshape(-1, Cmid_p), pp['w3']) + pp['b3']
    if pp['wsc'] is not None:
        y = y + bdot(x2, pp['wsc']) + pp['bsc']
    else:
        y = y + x2.astype(jnp.float32)
    out = jnp.maximum(y, 0.0).reshape(B, H, W, Cout_p)[..., :Cout]
    return jnp.transpose(out, (0, 3, 1, 2))


# ---------------------------------------------------------------------------
if __name__ == "__main__":
    base_key = jax.random.PRNGKey(0)

    def run_case(name, case_idx, B, Cin, Cmid, Cout, H, W, M, G, r, L):
        d = max(Cmid // r, L)
        key = jax.random.fold_in(base_key, case_idx)
        kx, kp = jax.random.split(key)
        x = jax.random.normal(kx, (B, Cin, H, W), jnp.float32)
        raw = init_raw_params(kp, Cin, Cmid, Cout, M, G, d)
        pp = prepare_params(raw, Cin, Cmid, Cout, M, G, d)

        out = jax.block_until_ready(sk_unit_forward(x, pp, M=M, Cout=Cout))
        ref = jax.block_until_ready(sk_unit_reference(x, pp, M=M, Cout=Cout))

        out_np, ref_np = np.asarray(out), np.asarray(ref)
        assert out.shape == (B, Cout, H, W), f"{name}: bad shape {out.shape}"
        assert np.isfinite(out_np).all(), f"{name}: non-finite output"
        max_err = float(np.max(np.abs(out_np - ref_np)))
        assert np.allclose(out_np, ref_np, atol=2e-2, rtol=2e-2), \
            f"{name}: max_err={max_err}"

    # Projection-shortcut SKUnit: in=32, mid=32, out=64, M=2, G=32, r=16, L=64
    run_case("proj", 0, B=2, Cin=32, Cmid=32, Cout=64, H=16, W=16, M=2, G=32, r=16, L=64)
    # Identity-shortcut SKUnit (in == out), B=1 to exercise the flattened fused grid
    run_case("ident", 1, B=1, Cin=64, Cmid=32, Cout=64, H=8, W=8, M=2, G=32, r=16, L=64)

    print("KERNEL_OK")
</pallas_src>

<mosaic_0001>
module attributes {stable_mosaic.version = 11 : i64} {
  func.func @_mm_bias_act_kernel(%arg0: i32, %arg1: memref<256x128xbf16, #tpu.memory_space<vmem>>, %arg2: memref<128x128xbf16, #tpu.memory_space<vmem>>, %arg3: memref<1x128xf32, #tpu.memory_space<vmem>>, %arg4: memref<256x128xbf16, #tpu.memory_space<vmem>>) attributes {dimension_semantics = [#tpu.dimension_semantics<parallel>], iteration_bounds = array<i64: 2>, scalar_prefetch = 0 : i64, scratch_operands = 0 : i64, tpu.core_type = #tpu.core_type<tc>, window_params = [{transform_indices = @transform_0, window_bounds = array<i64: 256, 128>}, {pipeline_mode = #tpu.pipeline_mode<synchronous>, transform_indices = @transform_1, window_bounds = array<i64: 128, 128>}, {pipeline_mode = #tpu.pipeline_mode<synchronous>, transform_indices = @transform_2, window_bounds = array<i64: 1, 128>}, {transform_indices = @transform_3, window_bounds = array<i64: 256, 128>}]} {
    %c0 = arith.constant 0 : index
    %c0_0 = arith.constant 0 : index
    %0 = vector.load %arg1[%c0, %c0_0] : memref<256x128xbf16, #tpu.memory_space<vmem>>, vector<256x128xbf16>
    %c0_1 = arith.constant 0 : index
    %c0_2 = arith.constant 0 : index
    %1 = vector.load %arg2[%c0_1, %c0_2] : memref<128x128xbf16, #tpu.memory_space<vmem>>, vector<128x128xbf16>
    %cst = arith.constant dense<0.000000e+00> : vector<256x128xf32>
    %2 = tpu.matmul %0, %1, %cst {dimension_numbers = #tpu.dot_dimension_numbers<[1], [0], [0], [1], [0, 0, 1, 1], [], []>} : vector<256x128xbf16>, vector<128x128xbf16>, vector<256x128xf32> -> vector<256x128xf32>
    %c0_3 = arith.constant 0 : index
    %c0_4 = arith.constant 0 : index
    %3 = vector.load %arg3[%c0_3, %c0_4] : memref<1x128xf32, #tpu.memory_space<vmem>>, vector<1x128xf32>
    %4 = vector.broadcast %3 : vector<1x128xf32> to vector<256x128xf32>
    %5 = arith.addf %2, %4 : vector<256x128xf32>
    %cst_5 = arith.constant 0.000000e+00 : f32
    %6 = vector.broadcast %cst_5 : f32 to vector<256x128xf32>
    %7 = arith.maximumf %5, %6 : vector<256x128xf32>
    %8 = arith.truncf %7 : vector<256x128xf32> to vector<256x128xbf16>
    %c0_6 = arith.constant 0 : index
    %c0_7 = arith.constant 0 : index
    %9 = vector.load %arg4[%c0_6, %c0_7] : memref<256x128xbf16, #tpu.memory_space<vmem>>, vector<256x128xbf16>
    tpu.vector_store %arg4[%c0_6, %c0_7], %8 {strides = array<i32>} : memref<256x128xbf16, #tpu.memory_space<vmem>>, vector<256x128xbf16>,
    return
  }
  func.func @transform_0(%arg0: i32) -> (i32, i32) {
    %c0_i32 = arith.constant 0 : i32
    %c0_i32_0 = arith.constant 0 : i32
    return %arg0, %c0_i32 : i32, i32
  }
  func.func @transform_1(%arg0: i32) -> (i32, i32) {
    %c0_i32 = arith.constant 0 : i32
    %c0_i32_0 = arith.constant 0 : i32
    %c0_i32_1 = arith.constant 0 : i32
    return %c0_i32, %c0_i32_0 : i32, i32
  }
  func.func @transform_2(%arg0: i32) -> (i32, i32) {
    %c0_i32 = arith.constant 0 : i32
    %c0_i32_0 = arith.constant 0 : i32
    %c0_i32_1 = arith.constant 0 : i32
    return %c0_i32, %c0_i32_0 : i32, i32
  }
  func.func @transform_3(%arg0: i32) -> (i32, i32) {
    %c0_i32 = arith.constant 0 : i32
    %c0_i32_0 = arith.constant 0 : i32
    return %arg0, %c0_i32 : i32, i32
  }
}

</mosaic_0001>

<llo_original>
// kernel: tpu_custom_call.1
$region0: #{tpu_custom_call.1}
  #allocation0 [shape = 'u32[]', space=smem, size = 0x4, offset = 0x4, fixed_abs, tag = 'smem constant byte address 0x4 - core index']
  #allocation1 [shape = 'u32[144,128]{1,0:T(1,128)}', space=vmem, size = 0x12000, scoped, tag = 'internal scratch']
  %s0 = inlined_call_operand.hbm [shape: bf16[512,128], index: 0, kind: input, shape index: {}]
  %s1 = inlined_call_operand.hbm [shape: bf16[128,128], index: 1, kind: input, shape index: {}]
  %s2 = inlined_call_operand.vmem [shape: f32[1,128], index: 2, kind: input, shape index: {}]
  %s3 = inlined_call_operand.hbm [shape: bf16[512,128], index: 3, kind: output, shape index: {}]
  %s4 = sld [smem:[#allocation0]]
  $region53: #{tpu_custom_call.1} parent=0
    _
  %s6 = ssub.s32 1, %s4
  %s7 = scalar_select 0, %s6, %s4
  $region1: #{tpu_custom_call.1} parent=0
    #allocation2 [shape = 'u8[131072]{0}', space=vmem, size = 0x20000, scoped, tag = 'input window, operand 0']
    #allocation3 [shape = 's32[2]{0}', space=sflag, size = 0x8, scoped, tag = 'scoped memory for tpu_custom_call.1']
    #allocation4 [shape = 's32[2]{0}', space=sflag, size = 0x8, scoped, tag = 'scoped memory for tpu_custom_call.1']
    #allocation5 [shape = 'u8[32768]{0}', space=vmem, size = 0x8000, scoped, tag = 'input window, operand 1, single buffered']
    #allocation6 [shape = 's32[1]{0}', space=sflag, size = 0x4, scoped, tag = 'scoped memory for tpu_custom_call.1']
    #allocation7 [shape = 'u8[131072]{0}', space=vmem, size = 0x20000, scoped, tag = 'output window, operand 0']
    %8 = vsyncpa [#allocation3], 0
    %s9 = scalar_lea.sflag [#allocation3], 1
    %10 = vsyncpa %s9, 0
    %11 = vsyncpa [#allocation6], 0
    %12 = vsyncpa [#allocation4], 0
    %s13 = scalar_lea.sflag [#allocation4], 1
    %14 = vsyncpa %s13, 0
    loop: start=0, step=1, limit=4
    $region2: #{tpu_custom_call.1} parent=1 // loop_pre_header
      _
    $region3: #{tpu_custom_call.1} parent=1 // loop_header
      %s16 = sphi 0, %s20
      %p17 = scmp.ge.s32.totalorder %s16, 4
      %s26 = sphi 0, %s28
      %s29 = sphi 0, %s26
      %s30 = sphi 0, %s29
      %s46 = sphi 0, %s30
      %s50 = sphi 0, %s50
      %s52 = sphi 0, %s50
      %s53 = sphi 0, %s52
      %s67 = sphi 0, %s53
      %s71 = sphi 0, %s71
      %s73 = sphi 0, %s71
      %s74 = sphi 0, %s73
      %s88 = sphi 0, %s74
      %s94 = sphi 0, %s96
      %s97 = sphi 0, %s94
      %s98 = sphi 0, %s97
      %s114 = sphi 0, %s98
    $region4: #{tpu_custom_call.1} parent=1 // loop_header_branch
      %19 = sbr.rel (%p17) target = $region8
    $region5: #{tpu_custom_call.1} parent=1 // loop_body
      %s21 = ssub.s32 %s16, 1
      %s22 = ssub.s32 %s16, 2
      %s23 = sadd.s32 %s16, 1
      %s24 = ssub.s32 %s16, %s23
      %p25 = scmp.eq.s32.totalorder %s24, 0
      %s27 = sadd.s32 %s26, 1
      %s28 = scalar_select %p25, %s26, %s27
      %p31 = pneg %p25
      %p32 = scmp.eq.s32.totalorder %s16, 1
      %p33 = por %p31, %p32
      %p34 = scmp.ne.s32.totalorder %s26, %s29
      %p35 = scmp.eq.s32.totalorder %s16, 0
      %p36 = por %p34, %p35
      %p37 = scmp.ne.s32.totalorder %s26, %s29
      %p38 = scmp.eq.s32.totalorder %s21, 1
      %p39 = por %p37, %p38
      %p40 = scmp.ne.s32.totalorder %s29, %s30
      %p41 = scmp.eq.s32.totalorder %s21, 0
      %p42 = por %p40, %p41
      %p43 = scmp.ne.s32.totalorder %s29, %s30
      %p44 = scmp.eq.s32.totalorder %s22, 1
      %p45 = por %p43, %p44
      %p47 = scmp.ne.s32.totalorder %s30, %s46
      %p48 = scmp.eq.s32.totalorder %s22, 0
      %p49 = por %p47, %p48
      %s51 = sadd.s32 %s50, 1
      %p54 = scmp.eq.s32.totalorder %s16, 1
      %p55 = scmp.ne.s32.totalorder %s50, %s52
      %p56 = scmp.eq.s32.totalorder %s16, 0
      %p57 = por %p55, %p56
      %p58 = scmp.ne.s32.totalorder %s50, %s52
      %p59 = scmp.eq.s32.totalorder %s21, 1
      %p60 = por %p58, %p59
      %p61 = scmp.ne.s32.totalorder %s52, %s53
      %p62 = scmp.eq.s32.totalorder %s21, 0
      %p63 = por %p61, %p62
      %p64 = scmp.ne.s32.totalorder %s52, %s53
      %p65 = scmp.eq.s32.totalorder %s22, 1
      %p66 = por %p64, %p65
      %p68 = scmp.ne.s32.totalorder %s53, %s67
      %p69 = scmp.eq.s32.totalorder %s22, 0
      %p70 = por %p68, %p69
      %s72 = sadd.s32 %s71, 1
      %p75 = scmp.eq.s32.totalorder %s16, 1
      %p76 = scmp.ne.s32.totalorder %s71, %s73
      %p77 = scmp.eq.s32.totalorder %s16, 0
      %p78 = por %p76, %p77
      %p79 = scmp.ne.s32.totalorder %s71, %s73
      %p80 = scmp.eq.s32.totalorder %s21, 1
      %p81 = por %p79, %p80
      %p82 = scmp.ne.s32.totalorder %s73, %s74
      %p83 = scmp.eq.s32.totalorder %s21, 0
      %p84 = por %p82, %p83
      %p85 = scmp.ne.s32.totalorder %s73, %s74
      %p86 = scmp.eq.s32.totalorder %s22, 1
      %p87 = por %p85, %p86
      %p89 = scmp.ne.s32.totalorder %s74, %s88
      %p90 = scmp.eq.s32.totalorder %s22, 0
      %p91 = por %p89, %p90
      %s92 = ssub.s32 %s16, %s23
      %p93 = scmp.eq.s32.totalorder %s92, 0
      %s95 = sadd.s32 %s94, 1
      %s96 = scalar_select %p93, %s94, %s95
      %p99 = pneg %p93
      %p100 = scmp.eq.s32.totalorder %s16, 1
      %p101 = por %p99, %p100
      %p102 = scmp.ne.s32.totalorder %s94, %s97
      %p103 = scmp.eq.s32.totalorder %s16, 0
      %p104 = por %p102, %p103
      %p105 = scmp.ne.s32.totalorder %s94, %s97
      %p106 = scmp.eq.s32.totalorder %s21, 1
      %p107 = por %p105, %p106
      %p108 = scmp.ne.s32.totalorder %s97, %s98
      %p109 = scmp.eq.s32.totalorder %s21, 0
      %p110 = por %p108, %p109
      %p111 = scmp.ne.s32.totalorder %s97, %s98
      %p112 = scmp.eq.s32.totalorder %s22, 1
      %p113 = por %p111, %p112
      %p115 = scmp.ne.s32.totalorder %s98, %s114
      %p116 = scmp.eq.s32.totalorder %s22, 0
      %p117 = por %p115, %p116
      %p118 = scmp.le.s32.totalorder 1, %s16
      %p119 = scmp.lt.s32.totalorder %s16, 3
      %p120 = pnand %p118, %p119
      %p121 = pneg %p120
      // Predicated region
      $region9: #{tpu_custom_call.1} parent=5 // pred_check
        _
      $region10: #{tpu_custom_call.1} parent=5 // pred_check_branch
        %123 = sbr.rel (%p120) target = $region12
      $region11: #{tpu_custom_call.1} parent=5 // pred_region
        %s124 = ssub.s32 %s16, 1
        // Predicated region
        $region13: #{tpu_custom_call.1} parent=11 // pred_check
          %p125 = pneg %p63
        $region14: #{tpu_custom_call.1} parent=11 // pred_check_branch
          %127 = sbr.rel (%p125) target = $region16
        $region15: #{tpu_custom_call.1} parent=11 // pred_region
          %s129 = ssub.s32 1024, 1024
          %130 = vsyncadd [#allocation6], %s129
          %s131 = sshll.u32 [#allocation5], 4
          %s132 = int_to_ptr.vmem [resolvable:$true] %s131
          %137 = dma.hbm_to_vmem [thread:$0]  %s1, 1024, %s132, [#allocation6], 64, 64, 4
        $region16: #{tpu_custom_call.1} parent=11 // pred_fallthru
          _
        // Predicated region
        $region17: #{tpu_custom_call.1} parent=11 // pred_check
          %p138 = pneg %p84
        $region18: #{tpu_custom_call.1} parent=11 // pred_check_branch
          %140 = sbr.rel (%p138) target = $region20
        $region19: #{tpu_custom_call.1} parent=11 // pred_region
          _
        $region20: #{tpu_custom_call.1} parent=11 // pred_fallthru
          _
      $region12: #{tpu_custom_call.1} parent=5 // pred_fallthru
        _
      %p141 = scmp.lt.s32.totalorder %s16, 2
      // Predicated region
      $region21: #{tpu_custom_call.1} parent=5 // pred_check
        %p142 = pneg %p141
      $region22: #{tpu_custom_call.1} parent=5 // pred_check_branch
        %144 = sbr.rel (%p142) target = $region24
      $region23: #{tpu_custom_call.1} parent=5 // pred_region
        // Predicated region
        $region25: #{tpu_custom_call.1} parent=23 // pred_check
          %p145 = pneg %p36
        $region26: #{tpu_custom_call.1} parent=23 // pred_check_branch
          %147 = sbr.rel (%p145) target = $region28
        $region27: #{tpu_custom_call.1} parent=23 // pred_region
          %s148 = sand.u32 %s26, 1
          %s149 = scalar_lea.sflag [#allocation3], %s148
          %s150 = sand.u32 %s26, 1
          %s151 = smul.addr %s150, 128
          %s152 = scalar_lea.vmem [#allocation2], %s151
          %s153 = smul.u32 32, %s16
          %s155 = ssub.s32 2048, 2048
          %156 = vsyncadd %s149, %s155
          %s157 = smul.addr %s153, 64
          %s158 = scalar_lea.hbm %s0, %s157
          %s159 = sshll.u32 %s152, 4
          %s160 = int_to_ptr.vmem [resolvable:$true] %s159
          %165 = dma.hbm_to_vmem [thread:$0]  %s158, 2048, %s160, %s149, 64, 64, 4
        $region28: #{tpu_custom_call.1} parent=23 // pred_fallthru
          _
      $region24: #{tpu_custom_call.1} parent=5 // pred_fallthru
        _
      %p166 = scmp.le.s32.totalorder 1, %s16
      %p167 = scmp.lt.s32.totalorder %s16, 3
      %p168 = pnand %p166, %p167
      %p169 = pneg %p168
      // Predicated region
      $region29: #{tpu_custom_call.1} parent=5 // pred_check
        _
      $region30: #{tpu_custom_call.1} parent=5 // pred_check_branch
        %171 = sbr.rel (%p168) target = $region32
      $region31: #{tpu_custom_call.1} parent=5 // pred_region
        %s172 = ssub.s32 %s16, 1
        %s173 = sand.u32 %s29, 1
        %s174 = scalar_lea.sflag [#allocation3], %s173
        %s175 = sand.u32 %s29, 1
        %s176 = smul.addr %s175, 128
        %s177 = scalar_lea.vmem [#allocation2], %s176
        // Predicated region
        $region33: #{tpu_custom_call.1} parent=31 // pred_check
          %p178 = pneg %p42
        $region34: #{tpu_custom_call.1} parent=31 // pred_check_branch
          %180 = sbr.rel (%p178) target = $region36
        $region35: #{tpu_custom_call.1} parent=31 // pred_region
          %181 = dma.done %s174, 2048
        $region36: #{tpu_custom_call.1} parent=31 // pred_fallthru
          _
        // Predicated region
        $region37: #{tpu_custom_call.1} parent=31 // pred_check
          %p182 = pneg %p63
        $region38: #{tpu_custom_call.1} parent=31 // pred_check_branch
          %184 = sbr.rel (%p182) target = $region40
        $region39: #{tpu_custom_call.1} parent=31 // pred_region
          %185 = dma.done [#allocation6], 1024
        $region40: #{tpu_custom_call.1} parent=31 // pred_fallthru
          _
        %s186 = sand.u32 %s29, 1
        %s187 = scalar_lea.sflag [#allocation3], %s186
        %s188 = sand.u32 %s29, 1
        %s189 = smul.addr %s188, 128
        %s190 = scalar_lea.vmem [#allocation2], %s189
        %p191 = pneg %p42
        %p192 = pneg %p39
        %p193 = pneg %p63
        %p194 = pneg %p60
        %p195 = pneg %p84
        %p196 = pneg %p81
        %p197 = pneg %p110
        %p198 = pneg %p107
        %s199 = sand.u32 %s97, 1
        %s200 = scalar_lea.sflag [#allocation4], %s199
        %s201 = sand.u32 %s97, 1
        %s202 = smul.addr %s201, 128
        %s203 = scalar_lea.vmem [#allocation7], %s202
        %s204 = smul.u32 32, %s21
        %s205 = smul.u32 32, %s21
        %v207 = vld [vmem:[%s177] sm:$0xf]
        %v208 = vld [vmem:[%s177 + $0x4] sm:$0xf]
        %v209 = vld [vmem:[%s177 + $0x8] sm:$0xf]
        %v210 = vld [vmem:[%s177 + $0xc] sm:$0xf]
        %v211 = vld [vmem:[%s177 + $0x10] sm:$0xf]
        %v212 = vld [vmem:[%s177 + $0x14] sm:$0xf]
        %v213 = vld [vmem:[%s177 + $0x18] sm:$0xf]
        %v214 = vld [vmem:[%s177 + $0x1c] sm:$0xf]
        %v215 = vld [vmem:[%s177 + $0x20] sm:$0xf]
        %v216 = vld [vmem:[%s177 + $0x24] sm:$0xf]
        %v217 = vld [vmem:[%s177 + $0x28] sm:$0xf]
        %v218 = vld [vmem:[%s177 + $0x2c] sm:$0xf]
        %v219 = vld [vmem:[%s177 + $0x30] sm:$0xf]
        %v220 = vld [vmem:[%s177 + $0x34] sm:$0xf]
        %v221 = vld [vmem:[%s177 + $0x38] sm:$0xf]
        %v222 = vld [vmem:[%s177 + $0x3c] sm:$0xf]
        %v223 = vld [vmem:[%s177 + $0x40] sm:$0xf]
        %v224 = vld [vmem:[%s177 + $0x44] sm:$0xf]
        %v225 = vld [vmem:[%s177 + $0x48] sm:$0xf]
        %v226 = vld [vmem:[%s177 + $0x4c] sm:$0xf]
        %v227 = vld [vmem:[%s177 + $0x50] sm:$0xf]
        %v228 = vld [vmem:[%s177 + $0x54] sm:$0xf]
        %v229 = vld [vmem:[%s177 + $0x58] sm:$0xf]
        %v230 = vld [vmem:[%s177 + $0x5c] sm:$0xf]
        %v231 = vld [vmem:[%s177 + $0x60] sm:$0xf]
        %v232 = vld [vmem:[%s177 + $0x64] sm:$0xf]
        %v233 = vld [vmem:[%s177 + $0x68] sm:$0xf]
        %v234 = vld [vmem:[%s177 + $0x6c] sm:$0xf]
        %v235 = vld [vmem:[%s177 + $0x70] sm:$0xf]
        %v236 = vld [vmem:[%s177 + $0x74] sm:$0xf]
        %v237 = vld [vmem:[%s177 + $0x78] sm:$0xf]
        %v238 = vld [vmem:[%s177 + $0x7c] sm:$0xf]
        %v239 = vld [vmem:[#allocation5] sm:$0xf]
        %v240 = vld [vmem:[#allocation5 + $0x4] sm:$0xf]
        %v241 = vld [vmem:[#allocation5 + $0x8] sm:$0xf]
        %v242 = vld [vmem:[#allocation5 + $0xc] sm:$0xf]
        %v243 = vld [vmem:[#allocation5 + $0x10] sm:$0xf]
        %v244 = vld [vmem:[#allocation5 + $0x14] sm:$0xf]
        %v245 = vld [vmem:[#allocation5 + $0x18] sm:$0xf]
        %v246 = vld [vmem:[#allocation5 + $0x1c] sm:$0xf]
        %v247 = vld [vmem:[#allocation5 + $0x20] sm:$0xf]
        %v248 = vld [vmem:[#allocation5 + $0x24] sm:$0xf]
        %v249 = vld [vmem:[#allocation5 + $0x28] sm:$0xf]
        %v250 = vld [vmem:[#allocation5 + $0x2c] sm:$0xf]
        %v251 = vld [vmem:[#allocation5 + $0x30] sm:$0xf]
        %v252 = vld [vmem:[#allocation5 + $0x34] sm:$0xf]
        %v253 = vld [vmem:[#allocation5 + $0x38] sm:$0xf]
        %v254 = vld [vmem:[#allocation5 + $0x3c] sm:$0xf]
        %v255 = vld [vmem:[%s2] sm:$0x1]
        %v257 = vlaneseq
        %v258 = vshrl.u32 %v257, 7
        %v259 = vsub.s32 0, %v258
        %v260 = vrot.slane %v255, %v259
        %v294 = vunpack.c.l.b16 %v207
        %v295 = vunpack.c.l.b16 %v208
        %v296 = vunpack.c.l.b16 %v209
        %v297 = vunpack.c.l.b16 %v210
        %v298 = vunpack.c.l.b16 %v211
        %v299 = vunpack.c.l.b16 %v212
        %v300 = vunpack.c.l.b16 %v213
        %v301 = vunpack.c.l.b16 %v214
        %v302 = vunpack.c.l.b16 %v215
        %v303 = vunpack.c.l.b16 %v216
        %v304 = vunpack.c.l.b16 %v217
        %v305 = vunpack.c.l.b16 %v218
        %v306 = vunpack.c.l.b16 %v219
        %v307 = vunpack.c.l.b16 %v220
        %v308 = vunpack.c.l.b16 %v221
        %v309 = vunpack.c.l.b16 %v222
        %v310 = vunpack.c.l.b16 %v223
        %v311 = vunpack.c.l.b16 %v224
        %v312 = vunpack.c.l.b16 %v225
        %v313 = vunpack.c.l.b16 %v226
        %v314 = vunpack.c.l.b16 %v227
        %v315 = vunpack.c.l.b16 %v228
        %v316 = vunpack.c.l.b16 %v229
        %v317 = vunpack.c.l.b16 %v230
        %v318 = vunpack.c.l.b16 %v231
        %v319 = vunpack.c.l.b16 %v232
        %v320 = vunpack.c.l.b16 %v233
        %v321 = vunpack.c.l.b16 %v234
        %v322 = vunpack.c.l.b16 %v235
        %v323 = vunpack.c.l.b16 %v236
        %v324 = vunpack.c.l.b16 %v237
        %v325 = vunpack.c.l.b16 %v238
        %v326 = vpack.c.b16 %v295, %v294
        %v327 = vpack.c.b16 %v297, %v296
        %v328 = vpack.c.b16 %v299, %v298
        %v329 = vpack.c.b16 %v301, %v300
        %v330 = vpack.c.b16 %v303, %v302
        %v331 = vpack.c.b16 %v305, %v304
        %v332 = vpack.c.b16 %v307, %v306
        %v333 = vpack.c.b16 %v309, %v308
        %v334 = vpack.c.b16 %v311, %v310
        %v335 = vpack.c.b16 %v313, %v312
        %v336 = vpack.c.b16 %v315, %v314
        %v337 = vpack.c.b16 %v317, %v316
        %v338 = vpack.c.b16 %v319, %v318
        %v339 = vpack.c.b16 %v321, %v320
        %v340 = vpack.c.b16 %v323, %v322
        %v341 = vpack.c.b16 %v325, %v324
        %v374 = vunpack.c.l.b16 %v239
        %v375 = vunpack.c.l.b16 %v240
        %v376 = vunpack.c.l.b16 %v241
        %v377 = vunpack.c.l.b16 %v242
        %v378 = vunpack.c.l.b16 %v243
        %v379 = vunpack.c.l.b16 %v244
        %v380 = vunpack.c.l.b16 %v245
        %v381 = vunpack.c.l.b16 %v246
        %v382 = vunpack.c.l.b16 %v247
        %v383 = vunpack.c.l.b16 %v248
        %v384 = vunpack.c.l.b16 %v249
        %v385 = vunpack.c.l.b16 %v250
        %v386 = vunpack.c.l.b16 %v251
        %v387 = vunpack.c.l.b16 %v252
        %v388 = vunpack.c.l.b16 %v253
        %v389 = vunpack.c.l.b16 %v254
        %v390 = vpack.c.b16 %v375, %v374
        %v391 = vpack.c.b16 %v377, %v376
        %v392 = vpack.c.b16 %v379, %v378
        %v393 = vpack.c.b16 %v381, %v380
        %v394 = vpack.c.b16 %v383, %v382
        %v395 = vpack.c.b16 %v385, %v384
        %v396 = vpack.c.b16 %v387, %v386
        %v397 = vpack.c.b16 %v389, %v388
        %406 = vmatprep.subr.bf16.mxu0 0
        %407 = vmatpush1.bf16.msra.mxu0 %v397
        %408 = vmatprep.subr.bf16.mxu0 0
        %409 = vmatpush1.bf16.msra.mxu0 %v396
        %410 = vmatprep.subr.bf16.mxu0 0
        %411 = vmatpush1.bf16.msra.mxu0 %v395
        %412 = vmatprep.subr.bf16.mxu0 0
        %413 = vmatpush1.bf16.msra.mxu0 %v394
        %414 = vmatprep.subr.bf16.mxu0 0
        %415 = vmatpush1.bf16.msra.mxu0 %v393
        %416 = vmatprep.subr.bf16.mxu0 0
        %417 = vmatpush1.bf16.msra.mxu0 %v392
        %418 = vmatprep.subr.bf16.mxu0 0
        %419 = vmatpush1.bf16.msra.mxu0 %v391
        %420 = vmatprep.subr.bf16.mxu0 0
        %421 = vmatpush1.bf16.msra.mxu0 %v390
        %422 = vmatprep.subr.bf16.mxu0 0
        %423 = vmatpush2.bf16.msra.mxu0 0
        %424 = vmatprep.subr.bf16.mxu0 0
        %425 = vmatpush2.bf16.msra.mxu0 0
        %426 = vmatprep.subr.bf16.mxu0 0
        %427 = vmatpush2.bf16.msra.mxu0 0
        %428 = vmatprep.subr.bf16.mxu0 0
        %429 = vmatpush2.bf16.msra.mxu0 0
        %430 = vmatprep.subr.bf16.mxu0 0
        %431 = vmatpush2.bf16.msra.mxu0 0
        %432 = vmatprep.subr.bf16.mxu0 0
        %433 = vmatpush2.bf16.msra.mxu0 0
        %434 = vmatprep.subr.bf16.mxu0 0
        %435 = vmatpush2.bf16.msra.mxu0 0
        %436 = vmatprep.subr.bf16.mxu0 0
        %437 = vmatpush2.bf16.msra.mxu0 0
        %438 = vmatprep.mubr.bf16.mxu0 0
        %439 = vmatmul.mubr.bf16.gmra.mxu0 %v326
        %v440 = vpop.f32.mrf.mxu0
        %v441 = vadd.f32 %v260, %v440
        %v442 = vpop.f32.mrf.mxu0
        %v443 = vpop.f32.mrf.mxu0
        %v444 = vadd.f32 %v260, %v443
        %v445 = vpop.f32.mrf.mxu0
        %446 = vmatprep.mubr.bf16.mxu0 0
        %447 = vmatmul.mubr.bf16.gmra.mxu0 %v327
        %v448 = vpop.f32.mrf.mxu0
        %v449 = vadd.f32 %v260, %v448
        %v450 = vpop.f32.mrf.mxu0
        %v451 = vpop.f32.mrf.mxu0
        %v452 = vadd.f32 %v260, %v451
        %v453 = vpop.f32.mrf.mxu0
        %454 = vmatprep.mubr.bf16.mxu0 0
        %455 = vmatmul.mubr.bf16.gmra.mxu0 %v328
        %v456 = vpop.f32.mrf.mxu0
        %v457 = vadd.f32 %v260, %v456
        %v458 = vpop.f32.mrf.mxu0
        %v459 = vpop.f32.mrf.mxu0
        %v460 = vadd.f32 %v260, %v459
        %v461 = vpop.f32.mrf.mxu0
        %462 = vmatprep.mubr.bf16.mxu0 0
        %463 = vmatmul.mubr.bf16.gmra.mxu0 %v329
        %v464 = vpop.f32.mrf.mxu0
        %v465 = vadd.f32 %v260, %v464
        %v466 = vpop.f32.mrf.mxu0
        %v467 = vpop.f32.mrf.mxu0
        %v468 = vadd.f32 %v260, %v467
        %v469 = vpop.f32.mrf.mxu0
        %470 = vmatprep.mubr.bf16.mxu0 0
        %471 = vmatmul.mubr.bf16.gmra.mxu0 %v330
        %v472 = vpop.f32.mrf.mxu0
        %v473 = vadd.f32 %v260, %v472
        %v474 = vpop.f32.mrf.mxu0
        %v475 = vpop.f32.mrf.mxu0
        %v476 = vadd.f32 %v260, %v475
        %v477 = vpop.f32.mrf.mxu0
        %478 = vmatprep.mubr.bf16.mxu0 0
        %479 = vmatmul.mubr.bf16.gmra.mxu0 %v331
        %v480 = vpop.f32.mrf.mxu0
        %v481 = vadd.f32 %v260, %v480
        %v482 = vpop.f32.mrf.mxu0
        %v483 = vpop.f32.mrf.mxu0
        %v484 = vadd.f32 %v260, %v483
        %v485 = vpop.f32.mrf.mxu0
        %486 = vmatprep.mubr.bf16.mxu0 0
        %487 = vmatmul.mubr.bf16.gmra.mxu0 %v332
        %v488 = vpop.f32.mrf.mxu0
        %v489 = vadd.f32 %v260, %v488
        %v490 = vpop.f32.mrf.mxu0
        %v491 = vpop.f32.mrf.mxu0
        %v492 = vadd.f32 %v260, %v491
        %v493 = vpop.f32.mrf.mxu0
        %494 = vmatprep.mubr.bf16.mxu0 0
        %495 = vmatmul.mubr.bf16.gmra.mxu0 %v333
        %v496 = vpop.f32.mrf.mxu0
        %v497 = vadd.f32 %v260, %v496
        %v498 = vpop.f32.mrf.mxu0
        %v499 = vpop.f32.mrf.mxu0
        %v500 = vadd.f32 %v260, %v499
        %v501 = vpop.f32.mrf.mxu0
        %502 = vmatprep.mubr.bf16.mxu0 0
        %503 = vmatmul.mubr.bf16.gmra.mxu0 %v334
        %v504 = vpop.f32.mrf.mxu0
        %v505 = vadd.f32 %v260, %v504
        %v506 = vpop.f32.mrf.mxu0
        %v507 = vpop.f32.mrf.mxu0
        %v508 = vadd.f32 %v260, %v507
        %v509 = vpop.f32.mrf.mxu0
        %510 = vmatprep.mubr.bf16.mxu0 0
        %511 = vmatmul.mubr.bf16.gmra.mxu0 %v335
        %v512 = vpop.f32.mrf.mxu0
        %v513 = vadd.f32 %v260, %v512
        %v514 = vpop.f32.mrf.mxu0
        %v515 = vpop.f32.mrf.mxu0
        %v516 = vadd.f32 %v260, %v515
        %v517 = vpop.f32.mrf.mxu0
        %518 = vmatprep.mubr.bf16.mxu0 0
        %519 = vmatmul.mubr.bf16.gmra.mxu0 %v336
        %v520 = vpop.f32.mrf.mxu0
        %v521 = vadd.f32 %v260, %v520
        %v522 = vpop.f32.mrf.mxu0
        %v523 = vpop.f32.mrf.mxu0
        %v524 = vadd.f32 %v260, %v523
        %v525 = vpop.f32.mrf.mxu0
        %526 = vmatprep.mubr.bf16.mxu0 0
        %527 = vmatmul.mubr.bf16.gmra.mxu0 %v337
        %v528 = vpop.f32.mrf.mxu0
        %v529 = vadd.f32 %v260, %v528
        %v530 = vpop.f32.mrf.mxu0
        %v531 = vpop.f32.mrf.mxu0
        %v532 = vadd.f32 %v260, %v531
        %v533 = vpop.f32.mrf.mxu0
        %534 = vmatprep.mubr.bf16.mxu0 0
        %535 = vmatmul.mubr.bf16.gmra.mxu0 %v338
        %v536 = vpop.f32.mrf.mxu0
        %v537 = vadd.f32 %v260, %v536
        %v538 = vpop.f32.mrf.mxu0
        %v539 = vpop.f32.mrf.mxu0
        %v540 = vadd.f32 %v260, %v539
        %v541 = vpop.f32.mrf.mxu0
        %542 = vmatprep.mubr.bf16.mxu0 0
        %543 = vmatmul.mubr.bf16.gmra.mxu0 %v339
        %v544 = vpop.f32.mrf.mxu0
        %v545 = vadd.f32 %v260, %v544
        %v546 = vpop.f32.mrf.mxu0
        %v547 = vpop.f32.mrf.mxu0
        %v548 = vadd.f32 %v260, %v547
        %v549 = vpop.f32.mrf.mxu0
        %550 = vmatprep.mubr.bf16.mxu0 0
        %551 = vmatmul.mubr.bf16.gmra.mxu0 %v340
        %v552 = vpop.f32.mrf.mxu0
        %v553 = vadd.f32 %v260, %v552
        %v554 = vpop.f32.mrf.mxu0
        %v555 = vpop.f32.mrf.mxu0
        %v556 = vadd.f32 %v260, %v555
        %v557 = vpop.f32.mrf.mxu0
        %558 = vmatprep.mubr.bf16.mxu0 0
        %559 = vmatmul.mubr.bf16.gmra.mxu0 %v341
        %v560 = vpop.f32.mrf.mxu0
        %v561 = vadd.f32 %v260, %v560
        %v562 = vpop.f32.mrf.mxu0
        %v563 = vpop.f32.mrf.mxu0
        %v564 = vadd.f32 %v260, %v563
        %v565 = vpop.f32.mrf.mxu0
        %566 = vdwg.mxu0
        %v567 = vmax.f32 %v441, 0.0
        %v568 = vmax.f32 %v444, 0.0
        %v569 = vmax.f32 %v449, 0.0
        %v570 = vmax.f32 %v452, 0.0
        %v571 = vmax.f32 %v457, 0.0
        %v572 = vmax.f32 %v460, 0.0
        %v573 = vmax.f32 %v465, 0.0
        %v574 = vmax.f32 %v468, 0.0
        %v575 = vmax.f32 %v473, 0.0
        %v576 = vmax.f32 %v476, 0.0
        %v577 = vmax.f32 %v481, 0.0
        %v578 = vmax.f32 %v484, 0.0
        %v579 = vmax.f32 %v489, 0.0
        %v580 = vmax.f32 %v492, 0.0
        %v581 = vmax.f32 %v497, 0.0
        %v582 = vmax.f32 %v500, 0.0
        %v583 = vmax.f32 %v505, 0.0
        %v584 = vmax.f32 %v508, 0.0
        %v585 = vmax.f32 %v513, 0.0
        %v586 = vmax.f32 %v516, 0.0
        %v587 = vmax.f32 %v521, 0.0
        %v588 = vmax.f32 %v524, 0.0
        %v589 = vmax.f32 %v529, 0.0
        %v590 = vmax.f32 %v532, 0.0
        %v591 = vmax.f32 %v537, 0.0
        %v592 = vmax.f32 %v540, 0.0
        %v593 = vmax.f32 %v545, 0.0
        %v594 = vmax.f32 %v548, 0.0
        %v595 = vmax.f32 %v553, 0.0
        %v596 = vmax.f32 %v556, 0.0
        %v597 = vmax.f32 %v561, 0.0
        %v598 = vmax.f32 %v564, 0.0
        %v599 = vpack.c.bf16 %v568, %v567
        %v600 = vpack.c.bf16 %v570, %v569
        %v601 = vpack.c.bf16 %v572, %v571
        %v602 = vpack.c.bf16 %v574, %v573
        %v603 = vpack.c.bf16 %v576, %v575
        %v604 = vpack.c.bf16 %v578, %v577
        %v605 = vpack.c.bf16 %v580, %v579
        %v606 = vpack.c.bf16 %v582, %v581
        %v607 = vpack.c.bf16 %v584, %v583
        %v608 = vpack.c.bf16 %v586, %v585
        %v609 = vpack.c.bf16 %v588, %v587
        %v610 = vpack.c.bf16 %v590, %v589
        %v611 = vpack.c.bf16 %v592, %v591
        %v612 = vpack.c.bf16 %v594, %v593
        %v613 = vpack.c.bf16 %v596, %v595
        %v614 = vpack.c.bf16 %v598, %v597
        %v631 = vunpack.c.l.b16 %v599
        %v632 = vunpack.c.h.b16 %v599
        %v633 = vunpack.c.l.b16 %v600
        %v634 = vunpack.c.h.b16 %v600
        %v635 = vunpack.c.l.b16 %v601
        %v636 = vunpack.c.h.b16 %v601
        %v637 = vunpack.c.l.b16 %v602
        %v638 = vunpack.c.h.b16 %v602
        %v639 = vunpack.c.l.b16 %v603
        %v640 = vunpack.c.h.b16 %v603
        %v641 = vunpack.c.l.b16 %v604
        %v642 = vunpack.c.h.b16 %v604
        %v643 = vunpack.c.l.b16 %v605
        %v644 = vunpack.c.h.b16 %v605
        %v645 = vunpack.c.l.b16 %v606
        %v646 = vunpack.c.h.b16 %v606
        %v647 = vunpack.c.l.b16 %v607
        %v648 = vunpack.c.h.b16 %v607
        %v649 = vunpack.c.l.b16 %v608
        %v650 = vunpack.c.h.b16 %v608
        %v651 = vunpack.c.l.b16 %v609
        %v652 = vunpack.c.h.b16 %v609
        %v653 = vunpack.c.l.b16 %v610
        %v654 = vunpack.c.h.b16 %v610
        %v655 = vunpack.c.l.b16 %v611
        %v656 = vunpack.c.h.b16 %v611
        %v657 = vunpack.c.l.b16 %v612
        %v658 = vunpack.c.h.b16 %v612
        %v659 = vunpack.c.l.b16 %v613
        %v660 = vunpack.c.h.b16 %v613
        %v661 = vunpack.c.l.b16 %v614
        %v662 = vunpack.c.h.b16 %v614
        %v663 = vpack.c.b16 %v631, %v631
        %v664 = vpack.c.b16 %v632, %v632
        %v665 = vpack.c.b16 %v633, %v633
        %v666 = vpack.c.b16 %v634, %v634
        %v667 = vpack.c.b16 %v635, %v635
        %v668 = vpack.c.b16 %v636, %v636
        %v669 = vpack.c.b16 %v637, %v637
        %v670 = vpack.c.b16 %v638, %v638
        %v671 = vpack.c.b16 %v639, %v639
        %v672 = vpack.c.b16 %v640, %v640
        %v673 = vpack.c.b16 %v641, %v641
        %v674 = vpack.c.b16 %v642, %v642
        %v675 = vpack.c.b16 %v643, %v643
        %v676 = vpack.c.b16 %v644, %v644
        %v677 = vpack.c.b16 %v645, %v645
        %v678 = vpack.c.b16 %v646, %v646
        %v679 = vpack.c.b16 %v647, %v647
        %v680 = vpack.c.b16 %v648, %v648
        %v681 = vpack.c.b16 %v649, %v649
        %v682 = vpack.c.b16 %v650, %v650
        %v683 = vpack.c.b16 %v651, %v651
        %v684 = vpack.c.b16 %v652, %v652
        %v685 = vpack.c.b16 %v653, %v653
        %v686 = vpack.c.b16 %v654, %v654
        %v687 = vpack.c.b16 %v655, %v655
        %v688 = vpack.c.b16 %v656, %v656
        %v689 = vpack.c.b16 %v657, %v657
        %v690 = vpack.c.b16 %v658, %v658
        %v691 = vpack.c.b16 %v659, %v659
        %v692 = vpack.c.b16 %v660, %v660
        %v693 = vpack.c.b16 %v661, %v661
        %v694 = vpack.c.b16 %v662, %v662
        %727 = vst [vmem:[%s203] sm:$0xf] %v663
        %728 = vst [vmem:[%s203 + $0x4] sm:$0xf] %v664
        %729 = vst [vmem:[%s203 + $0x8] sm:$0xf] %v665
        %730 = vst [vmem:[%s203 + $0xc] sm:$0xf] %v666
        %731 = vst [vmem:[%s203 + $0x10] sm:$0xf] %v667
        %732 = vst [vmem:[%s203 + $0x14] sm:$0xf] %v668
        %733 = vst [vmem:[%s203 + $0x18] sm:$0xf] %v669
        %734 = vst [vmem:[%s203 + $0x1c] sm:$0xf] %v670
        %735 = vst [vmem:[%s203 + $0x20] sm:$0xf] %v671
        %736 = vst [vmem:[%s203 + $0x24] sm:$0xf] %v672
        %737 = vst [vmem:[%s203 + $0x28] sm:$0xf] %v673
        %738 = vst [vmem:[%s203 + $0x2c] sm:$0xf] %v674
        %739 = vst [vmem:[%s203 + $0x30] sm:$0xf] %v675
        %740 = vst [vmem:[%s203 + $0x34] sm:$0xf] %v676
        %741 = vst [vmem:[%s203 + $0x38] sm:$0xf] %v677
        %742 = vst [vmem:[%s203 + $0x3c] sm:$0xf] %v678
        %743 = vst [vmem:[%s203 + $0x40] sm:$0xf] %v679
        %744 = vst [vmem:[%s203 + $0x44] sm:$0xf] %v680
        %745 = vst [vmem:[%s203 + $0x48] sm:$0xf] %v681
        %746 = vst [vmem:[%s203 + $0x4c] sm:$0xf] %v682
        %747 = vst [vmem:[%s203 + $0x50] sm:$0xf] %v683
        %748 = vst [vmem:[%s203 + $0x54] sm:$0xf] %v684
        %749 = vst [vmem:[%s203 + $0x58] sm:$0xf] %v685
        %750 = vst [vmem:[%s203 + $0x5c] sm:$0xf] %v686
        %751 = vst [vmem:[%s203 + $0x60] sm:$0xf] %v687
        %752 = vst [vmem:[%s203 + $0x64] sm:$0xf] %v688
        %753 = vst [vmem:[%s203 + $0x68] sm:$0xf] %v689
        %754 = vst [vmem:[%s203 + $0x6c] sm:$0xf] %v690
        %755 = vst [vmem:[%s203 + $0x70] sm:$0xf] %v691
        %756 = vst [vmem:[%s203 + $0x74] sm:$0xf] %v692
        %757 = vst [vmem:[%s203 + $0x78] sm:$0xf] %v693
        %758 = vst [vmem:[%s203 + $0x7c] sm:$0xf] %v694
        %s759 = sand.u32 %s97, 1
        %s760 = scalar_lea.sflag [#allocation4], %s759
        %s761 = sand.u32 %s97, 1
        %s762 = smul.addr %s761, 128
        %s763 = scalar_lea.vmem [#allocation7], %s762
        // Predicated region
        $region41: #{tpu_custom_call.1} parent=31 // pred_check
          %p764 = pneg %p107
        $region42: #{tpu_custom_call.1} parent=31 // pred_check_branch
          %766 = sbr.rel (%p764) target = $region44
        $region43: #{tpu_custom_call.1} parent=31 // pred_region
          %s767 = smul.u32 32, %s21
          %s769 = ssub.s32 2048, 2048
          %770 = vsyncadd %s760, %s769
          %s771 = smul.addr %s767, 64
          %s772 = scalar_lea.hbm %s3, %s771
          %s773 = sshll.u32 %s763, 4
          %s774 = int_to_ptr.vmem [resolvable:$true] %s773
          %779 = dma.vmem_to_hbm [thread:$0]  %s774, 2048, %s772, %s760, 64, 64, 4
        $region44: #{tpu_custom_call.1} parent=31 // pred_fallthru
          _
      $region32: #{tpu_custom_call.1} parent=5 // pred_fallthru
        _
      %p780 = scmp.le.s32.totalorder 2, %s16
      // Predicated region
      $region45: #{tpu_custom_call.1} parent=5 // pred_check
        %p781 = pneg %p780
      $region46: #{tpu_custom_call.1} parent=5 // pred_check_branch
        %783 = sbr.rel (%p781) target = $region48
      $region47: #{tpu_custom_call.1} parent=5 // pred_region
        %s784 = ssub.s32 %s16, 2
        // Predicated region
        $region49: #{tpu_custom_call.1} parent=47 // pred_check
          %p785 = pneg %p113
        $region50: #{tpu_custom_call.1} parent=47 // pred_check_branch
          %787 = sbr.rel (%p785) target = $region52
        $region51: #{tpu_custom_call.1} parent=47 // pred_region
          %s788 = sand.u32 %s98, 1
          %s789 = scalar_lea.sflag [#allocation4], %s788
          %s790 = sand.u32 %s98, 1
          %s791 = smul.addr %s790, 128
          %s792 = scalar_lea.vmem [#allocation7], %s791
          %793 = dma.done %s789, 2048
        $region52: #{tpu_custom_call.1} parent=47 // pred_fallthru
          _
      $region48: #{tpu_custom_call.1} parent=5 // pred_fallthru
        _
    $region6: #{tpu_custom_call.1} parent=1 // loop_footer
      %s20 = sadd.s32 1, %s16
    $region7: #{tpu_custom_call.1} parent=1 // loop_footer_branch
      %15 = sbr.rel target = $region3
    $region8: #{tpu_custom_call.1} parent=1 // loop_exit
      _
    %794 = vsyncpa [#allocation3], 1
    %s795 = scalar_lea.sflag [#allocation3], 1
    %796 = vsyncpa %s795, 1
    %797 = vsyncpa [#allocation6], 1
    %798 = vsyncpa [#allocation4], 1
    %s799 = scalar_lea.sflag [#allocation4], 1
    %800 = vsyncpa %s799, 1

</llo_original>
